<compile_context>
chip_gen: v6e
topology: v6e:2x2x1
jax: 0.10.0
libtpu: 0.0.40
codegen_flags: <defaults>
</compile_context>

<pallas_src>
import functools

import jax
import jax.numpy as jnp
from jax.experimental import pallas as pl
from jax.experimental.pallas import tpu as pltpu


def _round_up(n: int, m: int) -> int:
    return ((n + m - 1) // m) * m


def mlp_kernel(x_ref, w1_ref, b1_ref, w2_ref, b2_ref, w3_ref, b3_ref, o_ref):
    # Layer 1: bf16 MXU matmul, f32 accumulate, f32 epilogue (bias + ReLU).
    h = jnp.dot(x_ref[...], w1_ref[...], preferred_element_type=jnp.float32)
    h = jnp.maximum(h + b1_ref[...], 0.0)
    # Layer 2.
    h = jnp.dot(h.astype(w2_ref.dtype), w2_ref[...],
                preferred_element_type=jnp.float32)
    h = jnp.maximum(h + b2_ref[...], 0.0)
    # Layer 3 (no activation).
    out = jnp.dot(h.astype(w3_ref.dtype), w3_ref[...],
                  preferred_element_type=jnp.float32)
    o_ref[...] = (out + b3_ref[...]).astype(o_ref.dtype)


@functools.partial(jax.jit, static_argnames=("block_m",))
def net_forward(x, w1, b1, w2, b2, w3, b3, *, block_m=128):
    """3-layer MLP forward.  x: [batch, in]; weights in [in, out] layout
    (transposed vs. torch); biases [1, out]."""
    batch, in_f = x.shape
    hidden = w1.shape[1]
    out_f = w3.shape[1]

    # Lane-dense padded feature dims.
    K = _round_up(in_f, 128)
    H = _round_up(hidden, 128)
    O = _round_up(out_f, 128)

    # Batch tile: fill the MXU M dim when batch is large, else round to 8.
    TM = block_m if batch >= block_m else _round_up(batch, 8)
    B = _round_up(batch, TM)

    def pad2(a, rows, cols, dtype):
        a = a.astype(dtype)
        return jnp.pad(a, ((0, rows - a.shape[0]), (0, cols - a.shape[1])))

    bf16, f32 = jnp.bfloat16, jnp.float32
    xp = pad2(x, B, K, bf16)
    w1p, b1p = pad2(w1, K, H, bf16), pad2(b1, 1, H, f32)
    w2p, b2p = pad2(w2, H, H, bf16), pad2(b2, 1, H, f32)
    w3p, b3p = pad2(w3, H, O, bf16), pad2(b3, 1, O, f32)

    grid = (B // TM,)

    # Grid-invariant residents: same block index every step => no re-DMA.
    def const_spec(shape):
        return pl.BlockSpec(shape, lambda i: (0, 0))

    flops = 2 * B * (K * H + H * H + H * O)
    bytes_accessed = ((xp.size + w1p.size + w2p.size + w3p.size) * 2
                      + (b1p.size + b2p.size + b3p.size) * 4
                      + B * O * 4)

    out_p = pl.pallas_call(
        mlp_kernel,
        out_shape=jax.ShapeDtypeStruct((B, O), f32),
        grid=grid,
        in_specs=[
            pl.BlockSpec((TM, K), lambda i: (i, 0)),   # activations: tiled on batch
            const_spec((K, H)), const_spec((1, H)),    # W1, b1 (resident)
            const_spec((H, H)), const_spec((1, H)),    # W2, b2 (resident)
            const_spec((H, O)), const_spec((1, O)),    # W3, b3 (resident)
        ],
        out_specs=pl.BlockSpec((TM, O), lambda i: (i, 0)),
        compiler_params=pltpu.CompilerParams(
            dimension_semantics=("parallel",)),
        cost_estimate=pl.CostEstimate(
            flops=flops, transcendentals=0, bytes_accessed=bytes_accessed),
    )(xp, w1p, b1p, w2p, b2p, w3p, b3p)

    # Slice padded batch rows / output lanes back to the logical shape.
    return out_p[:batch, :out_f]


def init_linear(key, in_features, out_features):
    """PyTorch-style uniform init U(-1/sqrt(fan_in), 1/sqrt(fan_in)).
    Weight returned in [in, out] layout (transposed vs. torch)."""
    kw, kb = jax.random.split(key)
    bound = 1.0 / jnp.sqrt(jnp.float32(in_features))
    w = jax.random.uniform(kw, (in_features, out_features), jnp.float32,
                           minval=-bound, maxval=bound)
    b = jax.random.uniform(kb, (1, out_features), jnp.float32,
                           minval=-bound, maxval=bound)
    return w, b


if __name__ == "__main__":
    # Small shapes consistent with Net(input_size, hidden_size, out_size).
    batch, input_size, hidden_size, out_size = 8, 16, 32, 8

    key = jax.random.PRNGKey(0)
    kx, k1, k2, k3 = jax.random.split(key, 4)

    x = jax.random.normal(kx, (batch, input_size), jnp.float32)
    w1, b1 = init_linear(k1, input_size, hidden_size)
    w2, b2 = init_linear(k2, hidden_size, hidden_size)
    w3, b3 = init_linear(k3, hidden_size, out_size)

    out = net_forward(x, w1, b1, w2, b2, w3, b3)
    out = jax.block_until_ready(out)

    # Pure-JAX f32 reference (kernel uses bf16 MXU operands -> relaxed tol).
    ref = jnp.maximum(x @ w1 + b1, 0.0)
    ref = jnp.maximum(ref @ w2 + b2, 0.0)
    ref = ref @ w3 + b3

    assert out.shape == (batch, out_size)
    assert jnp.allclose(out, ref, atol=5e-2, rtol=5e-2), (
        f"max abs err {jnp.max(jnp.abs(out - ref))}")

    print("KERNEL_OK")
</pallas_src>

<mosaic_0001>
module attributes {stable_mosaic.version = 11 : i64} {
  func.func @mlp_kernel(%arg0: i32, %arg1: memref<8x128xbf16, #tpu.memory_space<vmem>>, %arg2: memref<128x128xbf16, #tpu.memory_space<vmem>>, %arg3: memref<1x128xf32, #tpu.memory_space<vmem>>, %arg4: memref<128x128xbf16, #tpu.memory_space<vmem>>, %arg5: memref<1x128xf32, #tpu.memory_space<vmem>>, %arg6: memref<128x128xbf16, #tpu.memory_space<vmem>>, %arg7: memref<1x128xf32, #tpu.memory_space<vmem>>, %arg8: memref<8x128xf32, #tpu.memory_space<vmem>>) attributes {dimension_semantics = [#tpu.dimension_semantics<parallel>], iteration_bounds = array<i64: 1>, scalar_prefetch = 0 : i64, scratch_operands = 0 : i64, tpu.core_type = #tpu.core_type<tc>, window_params = [{transform_indices = @transform_0, window_bounds = array<i64: 8, 128>}, {pipeline_mode = #tpu.pipeline_mode<synchronous>, transform_indices = @transform_1, window_bounds = array<i64: 128, 128>}, {pipeline_mode = #tpu.pipeline_mode<synchronous>, transform_indices = @transform_2, window_bounds = array<i64: 1, 128>}, {pipeline_mode = #tpu.pipeline_mode<synchronous>, transform_indices = @transform_3, window_bounds = array<i64: 128, 128>}, {pipeline_mode = #tpu.pipeline_mode<synchronous>, transform_indices = @transform_4, window_bounds = array<i64: 1, 128>}, {pipeline_mode = #tpu.pipeline_mode<synchronous>, transform_indices = @transform_5, window_bounds = array<i64: 128, 128>}, {pipeline_mode = #tpu.pipeline_mode<synchronous>, transform_indices = @transform_6, window_bounds = array<i64: 1, 128>}, {transform_indices = @transform_7, window_bounds = array<i64: 8, 128>}]} {
    %c0 = arith.constant 0 : index
    %c0_0 = arith.constant 0 : index
    %0 = vector.load %arg1[%c0, %c0_0] : memref<8x128xbf16, #tpu.memory_space<vmem>>, vector<8x128xbf16>
    %c0_1 = arith.constant 0 : index
    %c0_2 = arith.constant 0 : index
    %1 = vector.load %arg2[%c0_1, %c0_2] : memref<128x128xbf16, #tpu.memory_space<vmem>>, vector<128x128xbf16>
    %cst = arith.constant dense<0.000000e+00> : vector<8x128xf32>
    %2 = tpu.matmul %0, %1, %cst {dimension_numbers = #tpu.dot_dimension_numbers<[1], [0], [0], [1], [0, 0, 1, 1], [], []>} : vector<8x128xbf16>, vector<128x128xbf16>, vector<8x128xf32> -> vector<8x128xf32>
    %c0_3 = arith.constant 0 : index
    %c0_4 = arith.constant 0 : index
    %3 = vector.load %arg3[%c0_3, %c0_4] : memref<1x128xf32, #tpu.memory_space<vmem>>, vector<1x128xf32>
    %4 = vector.broadcast %3 : vector<1x128xf32> to vector<8x128xf32>
    %5 = arith.addf %2, %4 : vector<8x128xf32>
    %cst_5 = arith.constant 0.000000e+00 : f32
    %6 = vector.broadcast %cst_5 : f32 to vector<8x128xf32>
    %7 = arith.maximumf %5, %6 : vector<8x128xf32>
    %8 = arith.truncf %7 : vector<8x128xf32> to vector<8x128xbf16>
    %c0_6 = arith.constant 0 : index
    %c0_7 = arith.constant 0 : index
    %9 = vector.load %arg4[%c0_6, %c0_7] : memref<128x128xbf16, #tpu.memory_space<vmem>>, vector<128x128xbf16>
    %cst_8 = arith.constant dense<0.000000e+00> : vector<8x128xf32>
    %10 = tpu.matmul %8, %9, %cst_8 {dimension_numbers = #tpu.dot_dimension_numbers<[1], [0], [0], [1], [0, 0, 1, 1], [], []>} : vector<8x128xbf16>, vector<128x128xbf16>, vector<8x128xf32> -> vector<8x128xf32>
    %c0_9 = arith.constant 0 : index
    %c0_10 = arith.constant 0 : index
    %11 = vector.load %arg5[%c0_9, %c0_10] : memref<1x128xf32, #tpu.memory_space<vmem>>, vector<1x128xf32>
    %12 = vector.broadcast %11 : vector<1x128xf32> to vector<8x128xf32>
    %13 = arith.addf %10, %12 : vector<8x128xf32>
    %cst_11 = arith.constant 0.000000e+00 : f32
    %14 = vector.broadcast %cst_11 : f32 to vector<8x128xf32>
    %15 = arith.maximumf %13, %14 : vector<8x128xf32>
    %16 = arith.truncf %15 : vector<8x128xf32> to vector<8x128xbf16>
    %c0_12 = arith.constant 0 : index
    %c0_13 = arith.constant 0 : index
    %17 = vector.load %arg6[%c0_12, %c0_13] : memref<128x128xbf16, #tpu.memory_space<vmem>>, vector<128x128xbf16>
    %cst_14 = arith.constant dense<0.000000e+00> : vector<8x128xf32>
    %18 = tpu.matmul %16, %17, %cst_14 {dimension_numbers = #tpu.dot_dimension_numbers<[1], [0], [0], [1], [0, 0, 1, 1], [], []>} : vector<8x128xbf16>, vector<128x128xbf16>, vector<8x128xf32> -> vector<8x128xf32>
    %c0_15 = arith.constant 0 : index
    %c0_16 = arith.constant 0 : index
    %19 = vector.load %arg7[%c0_15, %c0_16] : memref<1x128xf32, #tpu.memory_space<vmem>>, vector<1x128xf32>
    %20 = vector.broadcast %19 : vector<1x128xf32> to vector<8x128xf32>
    %21 = arith.addf %18, %20 : vector<8x128xf32>
    %c0_17 = arith.constant 0 : index
    %c0_18 = arith.constant 0 : index
    %22 = vector.load %arg8[%c0_17, %c0_18] : memref<8x128xf32, #tpu.memory_space<vmem>>, vector<8x128xf32>
    tpu.vector_store %arg8[%c0_17, %c0_18], %21 {strides = array<i32>} : memref<8x128xf32, #tpu.memory_space<vmem>>, vector<8x128xf32>,
    return
  }
  func.func @transform_0(%arg0: i32) -> (i32, i32) {
    %c0_i32 = arith.constant 0 : i32
    %c0_i32_0 = arith.constant 0 : i32
    return %arg0, %c0_i32 : i32, i32
  }
  func.func @transform_1(%arg0: i32) -> (i32, i32) {
    %c0_i32 = arith.constant 0 : i32
    %c0_i32_0 = arith.constant 0 : i32
    %c0_i32_1 = arith.constant 0 : i32
    return %c0_i32, %c0_i32_0 : i32, i32
  }
  func.func @transform_2(%arg0: i32) -> (i32, i32) {
    %c0_i32 = arith.constant 0 : i32
    %c0_i32_0 = arith.constant 0 : i32
    %c0_i32_1 = arith.constant 0 : i32
    return %c0_i32, %c0_i32_0 : i32, i32
  }
  func.func @transform_3(%arg0: i32) -> (i32, i32) {
    %c0_i32 = arith.constant 0 : i32
    %c0_i32_0 = arith.constant 0 : i32
    %c0_i32_1 = arith.constant 0 : i32
    return %c0_i32, %c0_i32_0 : i32, i32
  }
  func.func @transform_4(%arg0: i32) -> (i32, i32) {
    %c0_i32 = arith.constant 0 : i32
    %c0_i32_0 = arith.constant 0 : i32
    %c0_i32_1 = arith.constant 0 : i32
    return %c0_i32, %c0_i32_0 : i32, i32
  }
  func.func @transform_5(%arg0: i32) -> (i32, i32) {
    %c0_i32 = arith.constant 0 : i32
    %c0_i32_0 = arith.constant 0 : i32
    %c0_i32_1 = arith.constant 0 : i32
    return %c0_i32, %c0_i32_0 : i32, i32
  }
  func.func @transform_6(%arg0: i32) -> (i32, i32) {
    %c0_i32 = arith.constant 0 : i32
    %c0_i32_0 = arith.constant 0 : i32
    %c0_i32_1 = arith.constant 0 : i32
    return %c0_i32, %c0_i32_0 : i32, i32
  }
  func.func @transform_7(%arg0: i32) -> (i32, i32) {
    %c0_i32 = arith.constant 0 : i32
    %c0_i32_0 = arith.constant 0 : i32
    return %arg0, %c0_i32 : i32, i32
  }
}

</mosaic_0001>

<llo_original>
// kernel: net_forward.1
$region0: #{net_forward.1}
  #allocation0 [shape = 'u32[]', space=smem, size = 0x4, offset = 0x4, fixed_abs, tag = 'smem constant byte address 0x4 - core index']
  #allocation1 [shape = 'u32[144,128]{1,0:T(1,128)}', space=vmem, size = 0x12000, scoped, tag = 'internal scratch']
  %s0 = inlined_call_operand.vmem [shape: bf16[8,128], index: 0, kind: input, shape index: {}]
  %s1 = inlined_call_operand.vmem [shape: bf16[128,128], index: 1, kind: input, shape index: {}]
  %s2 = inlined_call_operand.vmem [shape: f32[1,128], index: 2, kind: input, shape index: {}]
  %s3 = inlined_call_operand.vmem [shape: bf16[128,128], index: 3, kind: input, shape index: {}]
  %s4 = inlined_call_operand.vmem [shape: f32[1,128], index: 4, kind: input, shape index: {}]
  %s5 = inlined_call_operand.vmem [shape: bf16[128,128], index: 5, kind: input, shape index: {}]
  %s6 = inlined_call_operand.vmem [shape: f32[1,128], index: 6, kind: input, shape index: {}]
  %s7 = inlined_call_operand.hbm [shape: f32[8,128], index: 7, kind: output, shape index: {}]
  %s8 = sld [smem:[#allocation0]]
  $region38: #{net_forward.1} parent=0
    _
  %s10 = ssub.s32 1, %s8
  %s11 = scalar_select 0, %s10, %s8
  $region1: #{net_forward.1} parent=0
    #allocation2 [shape = 'u8[4096]{0}', space=vmem, size = 0x1000, scoped, tag = 'output window, operand 0, single buffered']
    #allocation3 [shape = 's32[1]{0}', space=sflag, size = 0x4, scoped, tag = 'scoped memory for net_forward.1']
    %12 = vsyncpa [#allocation3], 0
    // Predicated region
    $region2: #{net_forward.1} parent=1 // pred_check
      _
    $region3: #{net_forward.1} parent=1 // pred_check_branch
      %14 = sbr.rel (0) target = $region5
    $region4: #{net_forward.1} parent=1 // pred_region
      _
    $region5: #{net_forward.1} parent=1 // pred_fallthru
      _
    // Predicated region
    $region6: #{net_forward.1} parent=1 // pred_check
      _
    $region7: #{net_forward.1} parent=1 // pred_check_branch
      %16 = sbr.rel (0) target = $region9
    $region8: #{net_forward.1} parent=1 // pred_region
      _
    $region9: #{net_forward.1} parent=1 // pred_fallthru
      _
    // Predicated region
    $region10: #{net_forward.1} parent=1 // pred_check
      _
    $region11: #{net_forward.1} parent=1 // pred_check_branch
      %18 = sbr.rel (0) target = $region13
    $region12: #{net_forward.1} parent=1 // pred_region
      _
    $region13: #{net_forward.1} parent=1 // pred_fallthru
      _
    // Predicated region
    $region14: #{net_forward.1} parent=1 // pred_check
      _
    $region15: #{net_forward.1} parent=1 // pred_check_branch
      %20 = sbr.rel (0) target = $region17
    $region16: #{net_forward.1} parent=1 // pred_region
      _
    $region17: #{net_forward.1} parent=1 // pred_fallthru
      _
    // Predicated region
    $region18: #{net_forward.1} parent=1 // pred_check
      _
    $region19: #{net_forward.1} parent=1 // pred_check_branch
      %22 = sbr.rel (0) target = $region21
    $region20: #{net_forward.1} parent=1 // pred_region
      _
    $region21: #{net_forward.1} parent=1 // pred_fallthru
      _
    // Predicated region
    $region22: #{net_forward.1} parent=1 // pred_check
      _
    $region23: #{net_forward.1} parent=1 // pred_check_branch
      %24 = sbr.rel (0) target = $region25
    $region24: #{net_forward.1} parent=1 // pred_region
      _
    $region25: #{net_forward.1} parent=1 // pred_fallthru
      _
    // Predicated region
    $region26: #{net_forward.1} parent=1 // pred_check
      _
    $region27: #{net_forward.1} parent=1 // pred_check_branch
      %26 = sbr.rel (0) target = $region29
    $region28: #{net_forward.1} parent=1 // pred_region
      _
    $region29: #{net_forward.1} parent=1 // pred_fallthru
      _
    %v28 = vld [vmem:[%s0] sm:$0xf]
    %v29 = vld [vmem:[%s1] sm:$0xf]
    %v30 = vld [vmem:[%s1 + $0x4] sm:$0xf]
    %v31 = vld [vmem:[%s1 + $0x8] sm:$0xf]
    %v32 = vld [vmem:[%s1 + $0xc] sm:$0xf]
    %v33 = vld [vmem:[%s1 + $0x10] sm:$0xf]
    %v34 = vld [vmem:[%s1 + $0x14] sm:$0xf]
    %v35 = vld [vmem:[%s1 + $0x18] sm:$0xf]
    %v36 = vld [vmem:[%s1 + $0x1c] sm:$0xf]
    %v37 = vld [vmem:[%s1 + $0x20] sm:$0xf]
    %v38 = vld [vmem:[%s1 + $0x24] sm:$0xf]
    %v39 = vld [vmem:[%s1 + $0x28] sm:$0xf]
    %v40 = vld [vmem:[%s1 + $0x2c] sm:$0xf]
    %v41 = vld [vmem:[%s1 + $0x30] sm:$0xf]
    %v42 = vld [vmem:[%s1 + $0x34] sm:$0xf]
    %v43 = vld [vmem:[%s1 + $0x38] sm:$0xf]
    %v44 = vld [vmem:[%s1 + $0x3c] sm:$0xf]
    %v45 = vld [vmem:[%s2] sm:$0x1]
    %v47 = vlaneseq
    %v48 = vshrl.u32 %v47, 7
    %v49 = vsub.s32 0, %v48
    %v50 = vrot.slane %v45, %v49
    %v68 = vunpack.c.l.b16 %v29
    %v69 = vunpack.c.l.b16 %v30
    %v70 = vunpack.c.l.b16 %v31
    %v71 = vunpack.c.l.b16 %v32
    %v72 = vunpack.c.l.b16 %v33
    %v73 = vunpack.c.l.b16 %v34
    %v74 = vunpack.c.l.b16 %v35
    %v75 = vunpack.c.l.b16 %v36
    %v76 = vunpack.c.l.b16 %v37
    %v77 = vunpack.c.l.b16 %v38
    %v78 = vunpack.c.l.b16 %v39
    %v79 = vunpack.c.l.b16 %v40
    %v80 = vunpack.c.l.b16 %v41
    %v81 = vunpack.c.l.b16 %v42
    %v82 = vunpack.c.l.b16 %v43
    %v83 = vunpack.c.l.b16 %v44
    %v84 = vpack.c.b16 %v69, %v68
    %v85 = vpack.c.b16 %v71, %v70
    %v86 = vpack.c.b16 %v73, %v72
    %v87 = vpack.c.b16 %v75, %v74
    %v88 = vpack.c.b16 %v77, %v76
    %v89 = vpack.c.b16 %v79, %v78
    %v90 = vpack.c.b16 %v81, %v80
    %v91 = vpack.c.b16 %v83, %v82
    %100 = vmatprep.subr.bf16.mxu0 0
    %101 = vmatpush1.bf16.msra.mxu0 %v91
    %102 = vmatprep.subr.bf16.mxu0 0
    %103 = vmatpush1.bf16.msra.mxu0 %v90
    %104 = vmatprep.subr.bf16.mxu0 0
    %105 = vmatpush1.bf16.msra.mxu0 %v89
    %106 = vmatprep.subr.bf16.mxu0 0
    %107 = vmatpush1.bf16.msra.mxu0 %v88
    %108 = vmatprep.subr.bf16.mxu0 0
    %109 = vmatpush1.bf16.msra.mxu0 %v87
    %110 = vmatprep.subr.bf16.mxu0 0
    %111 = vmatpush1.bf16.msra.mxu0 %v86
    %112 = vmatprep.subr.bf16.mxu0 0
    %113 = vmatpush1.bf16.msra.mxu0 %v85
    %114 = vmatprep.subr.bf16.mxu0 0
    %115 = vmatpush1.bf16.msra.mxu0 %v84
    %116 = vmatprep.subr.bf16.mxu0 0
    %117 = vmatpush2.bf16.msra.mxu0 0
    %118 = vmatprep.subr.bf16.mxu0 0
    %119 = vmatpush2.bf16.msra.mxu0 0
    %120 = vmatprep.subr.bf16.mxu0 0
    %121 = vmatpush2.bf16.msra.mxu0 0
    %122 = vmatprep.subr.bf16.mxu0 0
    %123 = vmatpush2.bf16.msra.mxu0 0
    %124 = vmatprep.subr.bf16.mxu0 0
    %125 = vmatpush2.bf16.msra.mxu0 0
    %126 = vmatprep.subr.bf16.mxu0 0
    %127 = vmatpush2.bf16.msra.mxu0 0
    %128 = vmatprep.subr.bf16.mxu0 0
    %129 = vmatpush2.bf16.msra.mxu0 0
    %130 = vmatprep.subr.bf16.mxu0 0
    %131 = vmatpush2.bf16.msra.mxu0 0
    %132 = vmatprep.mubr.bf16.mxu0 0
    %133 = vmatmul.mubr.bf16.gmra.mxu0 %v28
    %v134 = vpop.f32.mrf.mxu0
    %v135 = vadd.f32 %v50, %v134
    %v136 = vpop.f32.mrf.mxu0
    %v137 = vpop.f32.mrf.mxu0
    %v138 = vpop.f32.mrf.mxu0
    %139 = vdwg.mxu0
    %v140 = vmax.f32 %v135, 0.0
    %v141 = vpack.c.bf16 %v140, %v140
    %v142 = vld [vmem:[%s3] sm:$0xf]
    %v143 = vld [vmem:[%s3 + $0x4] sm:$0xf]
    %v144 = vld [vmem:[%s3 + $0x8] sm:$0xf]
    %v145 = vld [vmem:[%s3 + $0xc] sm:$0xf]
    %v146 = vld [vmem:[%s3 + $0x10] sm:$0xf]
    %v147 = vld [vmem:[%s3 + $0x14] sm:$0xf]
    %v148 = vld [vmem:[%s3 + $0x18] sm:$0xf]
    %v149 = vld [vmem:[%s3 + $0x1c] sm:$0xf]
    %v150 = vld [vmem:[%s3 + $0x20] sm:$0xf]
    %v151 = vld [vmem:[%s3 + $0x24] sm:$0xf]
    %v152 = vld [vmem:[%s3 + $0x28] sm:$0xf]
    %v153 = vld [vmem:[%s3 + $0x2c] sm:$0xf]
    %v154 = vld [vmem:[%s3 + $0x30] sm:$0xf]
    %v155 = vld [vmem:[%s3 + $0x34] sm:$0xf]
    %v156 = vld [vmem:[%s3 + $0x38] sm:$0xf]
    %v157 = vld [vmem:[%s3 + $0x3c] sm:$0xf]
    %v158 = vld [vmem:[%s4] sm:$0x1]
    %v160 = vlaneseq
    %v161 = vshrl.u32 %v160, 7
    %v162 = vsub.s32 0, %v161
    %v163 = vrot.slane %v158, %v162
    %v181 = vunpack.c.l.b16 %v142
    %v182 = vunpack.c.l.b16 %v143
    %v183 = vunpack.c.l.b16 %v144
    %v184 = vunpack.c.l.b16 %v145
    %v185 = vunpack.c.l.b16 %v146
    %v186 = vunpack.c.l.b16 %v147
    %v187 = vunpack.c.l.b16 %v148
    %v188 = vunpack.c.l.b16 %v149
    %v189 = vunpack.c.l.b16 %v150
    %v190 = vunpack.c.l.b16 %v151
    %v191 = vunpack.c.l.b16 %v152
    %v192 = vunpack.c.l.b16 %v153
    %v193 = vunpack.c.l.b16 %v154
    %v194 = vunpack.c.l.b16 %v155
    %v195 = vunpack.c.l.b16 %v156
    %v196 = vunpack.c.l.b16 %v157
    %v197 = vpack.c.b16 %v182, %v181
    %v198 = vpack.c.b16 %v184, %v183
    %v199 = vpack.c.b16 %v186, %v185
    %v200 = vpack.c.b16 %v188, %v187
    %v201 = vpack.c.b16 %v190, %v189
    %v202 = vpack.c.b16 %v192, %v191
    %v203 = vpack.c.b16 %v194, %v193
    %v204 = vpack.c.b16 %v196, %v195
    %213 = vmatprep.subr.bf16.mxu0 0
    %214 = vmatpush1.bf16.msra.mxu0 %v204
    %215 = vmatprep.subr.bf16.mxu0 0
    %216 = vmatpush1.bf16.msra.mxu0 %v203
    %217 = vmatprep.subr.bf16.mxu0 0
    %218 = vmatpush1.bf16.msra.mxu0 %v202
    %219 = vmatprep.subr.bf16.mxu0 0
    %220 = vmatpush1.bf16.msra.mxu0 %v201
    %221 = vmatprep.subr.bf16.mxu0 0
    %222 = vmatpush1.bf16.msra.mxu0 %v200
    %223 = vmatprep.subr.bf16.mxu0 0
    %224 = vmatpush1.bf16.msra.mxu0 %v199
    %225 = vmatprep.subr.bf16.mxu0 0
    %226 = vmatpush1.bf16.msra.mxu0 %v198
    %227 = vmatprep.subr.bf16.mxu0 0
    %228 = vmatpush1.bf16.msra.mxu0 %v197
    %229 = vmatprep.subr.bf16.mxu0 0
    %230 = vmatpush2.bf16.msra.mxu0 0
    %231 = vmatprep.subr.bf16.mxu0 0
    %232 = vmatpush2.bf16.msra.mxu0 0
    %233 = vmatprep.subr.bf16.mxu0 0
    %234 = vmatpush2.bf16.msra.mxu0 0
    %235 = vmatprep.subr.bf16.mxu0 0
    %236 = vmatpush2.bf16.msra.mxu0 0
    %237 = vmatprep.subr.bf16.mxu0 0
    %238 = vmatpush2.bf16.msra.mxu0 0
    %239 = vmatprep.subr.bf16.mxu0 0
    %240 = vmatpush2.bf16.msra.mxu0 0
    %241 = vmatprep.subr.bf16.mxu0 0
    %242 = vmatpush2.bf16.msra.mxu0 0
    %243 = vmatprep.subr.bf16.mxu0 0
    %244 = vmatpush2.bf16.msra.mxu0 0
    %245 = vmatprep.mubr.bf16.mxu0 0
    %246 = vmatmul.mubr.bf16.gmra.mxu0 %v141
    %v247 = vpop.f32.mrf.mxu0
    %v248 = vadd.f32 %v163, %v247
    %v249 = vpop.f32.mrf.mxu0
    %v250 = vpop.f32.mrf.mxu0
    %v251 = vpop.f32.mrf.mxu0
    %252 = vdwg.mxu0
    %v253 = vmax.f32 %v248, 0.0
    %v254 = vpack.c.bf16 %v253, %v253
    %v255 = vld [vmem:[%s5] sm:$0xf]
    %v256 = vld [vmem:[%s5 + $0x4] sm:$0xf]
    %v257 = vld [vmem:[%s5 + $0x8] sm:$0xf]
    %v258 = vld [vmem:[%s5 + $0xc] sm:$0xf]
    %v259 = vld [vmem:[%s5 + $0x10] sm:$0xf]
    %v260 = vld [vmem:[%s5 + $0x14] sm:$0xf]
    %v261 = vld [vmem:[%s5 + $0x18] sm:$0xf]
    %v262 = vld [vmem:[%s5 + $0x1c] sm:$0xf]
    %v263 = vld [vmem:[%s5 + $0x20] sm:$0xf]
    %v264 = vld [vmem:[%s5 + $0x24] sm:$0xf]
    %v265 = vld [vmem:[%s5 + $0x28] sm:$0xf]
    %v266 = vld [vmem:[%s5 + $0x2c] sm:$0xf]
    %v267 = vld [vmem:[%s5 + $0x30] sm:$0xf]
    %v268 = vld [vmem:[%s5 + $0x34] sm:$0xf]
    %v269 = vld [vmem:[%s5 + $0x38] sm:$0xf]
    %v270 = vld [vmem:[%s5 + $0x3c] sm:$0xf]
    %v271 = vld [vmem:[%s6] sm:$0x1]
    %v273 = vlaneseq
    %v274 = vshrl.u32 %v273, 7
    %v275 = vsub.s32 0, %v274
    %v276 = vrot.slane %v271, %v275
    %v294 = vunpack.c.l.b16 %v255
    %v295 = vunpack.c.l.b16 %v256
    %v296 = vunpack.c.l.b16 %v257
    %v297 = vunpack.c.l.b16 %v258
    %v298 = vunpack.c.l.b16 %v259
    %v299 = vunpack.c.l.b16 %v260
    %v300 = vunpack.c.l.b16 %v261
    %v301 = vunpack.c.l.b16 %v262
    %v302 = vunpack.c.l.b16 %v263
    %v303 = vunpack.c.l.b16 %v264
    %v304 = vunpack.c.l.b16 %v265
    %v305 = vunpack.c.l.b16 %v266
    %v306 = vunpack.c.l.b16 %v267
    %v307 = vunpack.c.l.b16 %v268
    %v308 = vunpack.c.l.b16 %v269
    %v309 = vunpack.c.l.b16 %v270
    %v310 = vpack.c.b16 %v295, %v294
    %v311 = vpack.c.b16 %v297, %v296
    %v312 = vpack.c.b16 %v299, %v298
    %v313 = vpack.c.b16 %v301, %v300
    %v314 = vpack.c.b16 %v303, %v302
    %v315 = vpack.c.b16 %v305, %v304
    %v316 = vpack.c.b16 %v307, %v306
    %v317 = vpack.c.b16 %v309, %v308
    %326 = vmatprep.subr.bf16.mxu0 0
    %327 = vmatpush1.bf16.msra.mxu0 %v317
    %328 = vmatprep.subr.bf16.mxu0 0
    %329 = vmatpush1.bf16.msra.mxu0 %v316
    %330 = vmatprep.subr.bf16.mxu0 0
    %331 = vmatpush1.bf16.msra.mxu0 %v315
    %332 = vmatprep.subr.bf16.mxu0 0
    %333 = vmatpush1.bf16.msra.mxu0 %v314
    %334 = vmatprep.subr.bf16.mxu0 0
    %335 = vmatpush1.bf16.msra.mxu0 %v313
    %336 = vmatprep.subr.bf16.mxu0 0
    %337 = vmatpush1.bf16.msra.mxu0 %v312
    %338 = vmatprep.subr.bf16.mxu0 0
    %339 = vmatpush1.bf16.msra.mxu0 %v311
    %340 = vmatprep.subr.bf16.mxu0 0
    %341 = vmatpush1.bf16.msra.mxu0 %v310
    %342 = vmatprep.subr.bf16.mxu0 0
    %343 = vmatpush2.bf16.msra.mxu0 0
    %344 = vmatprep.subr.bf16.mxu0 0
    %345 = vmatpush2.bf16.msra.mxu0 0
    %346 = vmatprep.subr.bf16.mxu0 0
    %347 = vmatpush2.bf16.msra.mxu0 0
    %348 = vmatprep.subr.bf16.mxu0 0
    %349 = vmatpush2.bf16.msra.mxu0 0
    %350 = vmatprep.subr.bf16.mxu0 0
    %351 = vmatpush2.bf16.msra.mxu0 0
    %352 = vmatprep.subr.bf16.mxu0 0
    %353 = vmatpush2.bf16.msra.mxu0 0
    %354 = vmatprep.subr.bf16.mxu0 0
    %355 = vmatpush2.bf16.msra.mxu0 0
    %356 = vmatprep.subr.bf16.mxu0 0
    %357 = vmatpush2.bf16.msra.mxu0 0
    %358 = vmatprep.mubr.bf16.mxu0 0
    %359 = vmatmul.mubr.bf16.gmra.mxu0 %v254
    %v360 = vpop.f32.mrf.mxu0
    %v361 = vadd.f32 %v276, %v360
    %v362 = vpop.f32.mrf.mxu0
    %v363 = vpop.f32.mrf.mxu0
    %v364 = vpop.f32.mrf.mxu0
    %365 = vdwg.mxu0
    %366 = vst [vmem:[#allocation2] sm:$0xff] %v361
    // Predicated region
    $region30: #{net_forward.1} parent=1 // pred_check
      _
    $region31: #{net_forward.1} parent=1 // pred_check_branch
      %368 = sbr.rel (0) target = $region33
    $region32: #{net_forward.1} parent=1 // pred_region
      %s370 = ssub.s32 128, 128
      %371 = vsyncadd [#allocation3], %s370
      %s373 = sshll.u32 [#allocation2], 4
      %s374 = int_to_ptr.vmem [resolvable:$true] %s373
      %376 = dma.vmem_to_hbm [thread:$0]  %s374, 128, %s7, [#allocation3]
    $region33: #{net_forward.1} parent=1 // pred_fallthru
      _
    // Predicated region
    $region34: #{net_forward.1} parent=1 // pred_check
      _
    $region35: #{net_forward.1} parent=1 // pred_check_branch
      %378 = sbr.rel (0) target = $region37
    $region36: #{net_forward.1} parent=1 // pred_region
      %379 = dma.done [#allocation3], 128
    $region37: #{net_forward.1} parent=1 // pred_fallthru
      _
    %380 = vsyncpa [#allocation3], 1

</llo_original>
